<compile_context>
chip_gen: v7x
topology: tpu7x:2x2x1
jax: 0.10.0
libtpu: 0.0.40
codegen_flags: <defaults>
</compile_context>

<pallas_src>
import jax
import jax.numpy as jnp
from jax.experimental import pallas as pl
from jax.experimental.pallas import tpu as pltpu


def _round_up(n, m):
    return ((n + m - 1) // m) * m


def _task_predict_kernel(x_ref, w1_ref, b1_ref, w2_ref, b2_ref, o_ref):
    # x tile: [TB, in]; weights full: [in, hidden], [hidden, out_pad].
    x = x_ref[...].astype(jnp.float32)

    # Linear 1 + ReLU (MXU matmul, f32 accumulation).
    h = jnp.dot(x, w1_ref[...], preferred_element_type=jnp.float32) + b1_ref[...]
    h = jnp.maximum(h, 0.0)

    # Linear 2 (padded output columns have w2=0, b2=-1e30 -> prob 0 after softmax).
    logits = jnp.dot(h, w2_ref[...], preferred_element_type=jnp.float32) + b2_ref[...]

    # Numerically stable softmax along the last (lane) dim.
    m = jnp.max(logits, axis=-1, keepdims=True)
    e = jnp.exp(logits - m)
    denom = jnp.sum(e, axis=-1, keepdims=True)
    # approx reciprocal lowers to the EUP slot (otherwise idle except exp).
    o_ref[...] = (e * pl.reciprocal(denom, approx=True)).astype(o_ref.dtype)


def task_predict_net(x, w1, b1, w2, b2, *, tile_b=512):
    """x: [B, input_size]; w1: [input_size, hidden]; b1: [1, hidden];
    w2: [hidden, output]; b2: [1, output]. Returns [B, output] softmax probs."""
    B, in_size = x.shape
    hidden = w1.shape[1]
    out_size = w2.shape[1]
    assert w1.shape[0] == in_size and w2.shape[0] == hidden

    # --- Lane-dense output slab: pad output features to a multiple of 128. ---
    out_pad = _round_up(out_size, 128)
    w2p = jnp.pad(w2.astype(jnp.float32), ((0, 0), (0, out_pad - out_size)))
    b2p = jnp.pad(b2.astype(jnp.float32), ((0, 0), (0, out_pad - out_size)),
                  constant_values=-1e30)

    # --- Batch tiling: TB multiple of 8, grid over batch, weights resident. ---
    TB = min(tile_b, _round_up(B, 8))
    B_pad = _round_up(B, TB)
    xp = x.astype(jnp.float32)
    if B_pad != B:
        xp = jnp.pad(xp, ((0, B_pad - B), (0, 0)))
    num_tiles = B_pad // TB

    # NOTE: at these shapes the MXU is ~idle (K=16/N<=32); the realistic win for a
    # real model is fusing this into the surrounding kernel, not tuning inside it.
    flops = 2 * B_pad * (in_size * hidden + hidden * out_pad)
    bytes_accessed = 4 * (xp.size + w1.size + b1.size + w2p.size + b2p.size
                          + B_pad * out_pad)

    out = pl.pallas_call(
        _task_predict_kernel,
        out_shape=jax.ShapeDtypeStruct((B_pad, out_pad), jnp.float32),
        grid=(num_tiles,),
        in_specs=[
            pl.BlockSpec((TB, in_size), lambda i: (i, 0)),      # x: tiled over batch
            pl.BlockSpec((in_size, hidden), lambda i: (0, 0)),  # w1: VMEM-resident
            pl.BlockSpec((1, hidden), lambda i: (0, 0)),        # b1
            pl.BlockSpec((hidden, out_pad), lambda i: (0, 0)),  # w2 (padded cols)
            pl.BlockSpec((1, out_pad), lambda i: (0, 0)),       # b2 (padded cols)
        ],
        out_specs=pl.BlockSpec((TB, out_pad), lambda i: (i, 0)),
        compiler_params=pltpu.CompilerParams(
            dimension_semantics=("parallel",)),                 # both TCs on v7x
        cost_estimate=pl.CostEstimate(
            flops=flops,
            transcendentals=B_pad * out_pad,
            bytes_accessed=bytes_accessed),
    )(xp, w1.astype(jnp.float32), b1.astype(jnp.float32), w2p, b2p)

    return out[:B, :out_size]


def init_params(key, input_size, hidden_size, output_size):
    """Deterministic PyTorch-style (Kaiming-uniform-ish) init for the two Linear layers."""
    k1, k2, k3, k4 = jax.random.split(key, 4)
    bound1 = 1.0 / (input_size ** 0.5)
    bound2 = 1.0 / (hidden_size ** 0.5)
    w1 = jax.random.uniform(k1, (input_size, hidden_size), jnp.float32, -bound1, bound1)
    b1 = jax.random.uniform(k2, (1, hidden_size), jnp.float32, -bound1, bound1)
    w2 = jax.random.uniform(k3, (hidden_size, output_size), jnp.float32, -bound2, bound2)
    b2 = jax.random.uniform(k4, (1, output_size), jnp.float32, -bound2, bound2)
    return w1, b1, w2, b2


if __name__ == "__main__":
    # Small shapes consistent with the module: task one-hot input -> hidden -> output probs.
    batch, input_size, hidden_size, output_size = 8, 16, 32, 8

    key = jax.random.PRNGKey(0)
    kx, kp = jax.random.split(key)

    # One-hot-like task inputs (as the module's docstring suggests).
    task_ids = jax.random.randint(kx, (batch,), 0, input_size)
    x = jax.nn.one_hot(task_ids, input_size, dtype=jnp.float32)

    w1, b1, w2, b2 = init_params(kp, input_size, hidden_size, output_size)

    out = task_predict_net(x, w1, b1, w2, b2)
    out = jax.block_until_ready(out)

    # Reference check in plain JAX (tolerances loosened for approx reciprocal).
    h_ref = jnp.maximum(x @ w1 + b1, 0.0)
    ref = jax.nn.softmax(h_ref @ w2 + b2, axis=-1)
    assert out.shape == (batch, output_size)
    assert jnp.allclose(out, ref, atol=3e-3, rtol=0)
    assert jnp.allclose(jnp.sum(out, axis=-1), 1.0, atol=1e-2)

    print("KERNEL_OK")
</pallas_src>

<mosaic_0001>
module attributes {stable_mosaic.version = 11 : i64} {
  func.func @_task_predict_kernel(%arg0: i32, %arg1: memref<8x16xf32, #tpu.memory_space<vmem>>, %arg2: memref<16x32xf32, #tpu.memory_space<vmem>>, %arg3: memref<1x32xf32, #tpu.memory_space<vmem>>, %arg4: memref<32x128xf32, #tpu.memory_space<vmem>>, %arg5: memref<1x128xf32, #tpu.memory_space<vmem>>, %arg6: memref<8x128xf32, #tpu.memory_space<vmem>>) attributes {dimension_semantics = [#tpu.dimension_semantics<parallel>], iteration_bounds = array<i64: 1>, scalar_prefetch = 0 : i64, scratch_operands = 0 : i64, tpu.core_type = #tpu.core_type<tc>, window_params = [{transform_indices = @transform_0, window_bounds = array<i64: 8, 16>}, {pipeline_mode = #tpu.pipeline_mode<synchronous>, transform_indices = @transform_1, window_bounds = array<i64: 16, 32>}, {pipeline_mode = #tpu.pipeline_mode<synchronous>, transform_indices = @transform_2, window_bounds = array<i64: 1, 32>}, {pipeline_mode = #tpu.pipeline_mode<synchronous>, transform_indices = @transform_3, window_bounds = array<i64: 32, 128>}, {pipeline_mode = #tpu.pipeline_mode<synchronous>, transform_indices = @transform_4, window_bounds = array<i64: 1, 128>}, {transform_indices = @transform_5, window_bounds = array<i64: 8, 128>}]} {
    %c0 = arith.constant 0 : index
    %c0_0 = arith.constant 0 : index
    %0 = vector.load %arg1[%c0, %c0_0] : memref<8x16xf32, #tpu.memory_space<vmem>>, vector<8x16xf32>
    %c0_1 = arith.constant 0 : index
    %c0_2 = arith.constant 0 : index
    %1 = vector.load %arg2[%c0_1, %c0_2] : memref<16x32xf32, #tpu.memory_space<vmem>>, vector<16x32xf32>
    %cst = arith.constant dense<0.000000e+00> : vector<8x32xf32>
    %2 = tpu.matmul %0, %1, %cst {dimension_numbers = #tpu.dot_dimension_numbers<[1], [0], [0], [1], [0, 0, 1, 1], [], []>} : vector<8x16xf32>, vector<16x32xf32>, vector<8x32xf32> -> vector<8x32xf32>
    %c0_3 = arith.constant 0 : index
    %c0_4 = arith.constant 0 : index
    %3 = vector.load %arg3[%c0_3, %c0_4] : memref<1x32xf32, #tpu.memory_space<vmem>>, vector<1x32xf32>
    %4 = vector.broadcast %3 : vector<1x32xf32> to vector<8x32xf32>
    %5 = arith.addf %2, %4 : vector<8x32xf32>
    %cst_5 = arith.constant 0.000000e+00 : f32
    %6 = vector.broadcast %cst_5 : f32 to vector<8x32xf32>
    %7 = arith.maximumf %5, %6 : vector<8x32xf32>
    %c0_6 = arith.constant 0 : index
    %c0_7 = arith.constant 0 : index
    %8 = vector.load %arg4[%c0_6, %c0_7] : memref<32x128xf32, #tpu.memory_space<vmem>>, vector<32x128xf32>
    %cst_8 = arith.constant dense<0.000000e+00> : vector<8x128xf32>
    %9 = tpu.matmul %7, %8, %cst_8 {dimension_numbers = #tpu.dot_dimension_numbers<[1], [0], [0], [1], [0, 0, 1, 1], [], []>} : vector<8x32xf32>, vector<32x128xf32>, vector<8x128xf32> -> vector<8x128xf32>
    %c0_9 = arith.constant 0 : index
    %c0_10 = arith.constant 0 : index
    %10 = vector.load %arg5[%c0_9, %c0_10] : memref<1x128xf32, #tpu.memory_space<vmem>>, vector<1x128xf32>
    %11 = vector.broadcast %10 : vector<1x128xf32> to vector<8x128xf32>
    %12 = arith.addf %9, %11 : vector<8x128xf32>
    %cst_11 = arith.constant dense<0xFF800000> : vector<8xf32>
    %13 = vector.multi_reduction <maximumf>, %12, %cst_11 [1] : vector<8x128xf32> to vector<8xf32>
    %14 = vector.shape_cast %13 : vector<8xf32> to vector<8x1xf32>
    %15 = vector.broadcast %14 : vector<8x1xf32> to vector<8x128xf32>
    %16 = arith.subf %12, %15 : vector<8x128xf32>
    %17 = math.exp %16 : vector<8x128xf32>
    %cst_12 = arith.constant dense<0.000000e+00> : vector<8xf32>
    %18 = vector.multi_reduction <add>, %17, %cst_12 [1] : vector<8x128xf32> to vector<8xf32>
    %19 = vector.shape_cast %18 : vector<8xf32> to vector<8x1xf32>
    %20 = tpu.reciprocal %19 {approx = true} : vector<8x1xf32> -> vector<8x1xf32>
    %21 = vector.broadcast %20 : vector<8x1xf32> to vector<8x128xf32>
    %22 = arith.mulf %17, %21 : vector<8x128xf32>
    %c0_13 = arith.constant 0 : index
    %c0_14 = arith.constant 0 : index
    %23 = vector.load %arg6[%c0_13, %c0_14] : memref<8x128xf32, #tpu.memory_space<vmem>>, vector<8x128xf32>
    tpu.vector_store %arg6[%c0_13, %c0_14], %22 {strides = array<i32>} : memref<8x128xf32, #tpu.memory_space<vmem>>, vector<8x128xf32>,
    return
  }
  func.func @transform_0(%arg0: i32) -> (i32, i32) {
    %c0_i32 = arith.constant 0 : i32
    %c0_i32_0 = arith.constant 0 : i32
    return %arg0, %c0_i32 : i32, i32
  }
  func.func @transform_1(%arg0: i32) -> (i32, i32) {
    %c0_i32 = arith.constant 0 : i32
    %c0_i32_0 = arith.constant 0 : i32
    %c0_i32_1 = arith.constant 0 : i32
    return %c0_i32, %c0_i32_0 : i32, i32
  }
  func.func @transform_2(%arg0: i32) -> (i32, i32) {
    %c0_i32 = arith.constant 0 : i32
    %c0_i32_0 = arith.constant 0 : i32
    %c0_i32_1 = arith.constant 0 : i32
    return %c0_i32, %c0_i32_0 : i32, i32
  }
  func.func @transform_3(%arg0: i32) -> (i32, i32) {
    %c0_i32 = arith.constant 0 : i32
    %c0_i32_0 = arith.constant 0 : i32
    %c0_i32_1 = arith.constant 0 : i32
    return %c0_i32, %c0_i32_0 : i32, i32
  }
  func.func @transform_4(%arg0: i32) -> (i32, i32) {
    %c0_i32 = arith.constant 0 : i32
    %c0_i32_0 = arith.constant 0 : i32
    %c0_i32_1 = arith.constant 0 : i32
    return %c0_i32, %c0_i32_0 : i32, i32
  }
  func.func @transform_5(%arg0: i32) -> (i32, i32) {
    %c0_i32 = arith.constant 0 : i32
    %c0_i32_0 = arith.constant 0 : i32
    return %arg0, %c0_i32 : i32, i32
  }
}

</mosaic_0001>

<llo_original>
// kernel: tpu_custom_call.1
$region0: #{tpu_custom_call.1}
  #allocation0 [shape = 'u32[]', space=smem, size = 0x4, offset = 0x4, fixed_abs, tag = 'smem constant byte address 0x4 - core index']
  #allocation1 [shape = 'u32[144,128]{1,0:T(1,128)}', space=vmem, size = 0x12000, scoped, tag = 'internal scratch']
  %s0 = inlined_call_operand.hbm [shape: f32[8,16], index: 0, kind: input, shape index: {}]
  %s1 = inlined_call_operand.hbm [shape: f32[16,32], index: 1, kind: input, shape index: {}]
  %s2 = inlined_call_operand.vmem [shape: f32[1,32], index: 2, kind: input, shape index: {}]
  %s3 = inlined_call_operand.hbm [shape: f32[32,128], index: 3, kind: input, shape index: {}]
  %s4 = inlined_call_operand.vmem [shape: f32[1,128], index: 4, kind: input, shape index: {}]
  %s5 = inlined_call_operand.hbm [shape: f32[8,128], index: 5, kind: output, shape index: {}]
  %s6 = sld [smem:[#allocation0]]
  $region42: #{tpu_custom_call.1} parent=0
    _
  %s8 = ssub.s32 1, %s6
  %s9 = scalar_select 0, %s8, %s6
  $region1: #{tpu_custom_call.1} parent=0
    #allocation2 [shape = 'u8[4096]{0}', space=vmem, size = 0x1000, scoped, tag = 'input window, operand 0, single buffered']
    #allocation3 [shape = 's32[1]{0}', space=sflag, size = 0x4, scoped, tag = 'scoped memory for tpu_custom_call.1']
    #allocation4 [shape = 's32[1]{0}', space=sflag, size = 0x4, scoped, tag = 'scoped memory for tpu_custom_call.1']
    #allocation5 [shape = 'u8[8192]{0}', space=vmem, size = 0x2000, scoped, tag = 'input window, operand 1, single buffered']
    #allocation6 [shape = 's32[1]{0}', space=sflag, size = 0x4, scoped, tag = 'scoped memory for tpu_custom_call.1']
    #allocation7 [shape = 'u8[16384]{0}', space=vmem, size = 0x4000, scoped, tag = 'input window, operand 3, single buffered']
    #allocation8 [shape = 'u8[4096]{0}', space=vmem, size = 0x1000, scoped, tag = 'output window, operand 0, single buffered']
    %10 = vsyncpa [#allocation3], 0
    %11 = vsyncpa [#allocation6], 0
    %12 = vsyncpa [#allocation4], 0
    // Predicated region
    $region2: #{tpu_custom_call.1} parent=1 // pred_check
      _
    $region3: #{tpu_custom_call.1} parent=1 // pred_check_branch
      %14 = sbr.rel (0) target = $region5
    $region4: #{tpu_custom_call.1} parent=1 // pred_region
      %s16 = ssub.s32 128, 128
      %17 = vsyncadd [#allocation3], %s16
      %s19 = sshll.u32 [#allocation2], 4
      %s20 = int_to_ptr.vmem [resolvable:$true] %s19
      %22 = dma.hbm_to_vmem [thread:$0]  %s0, 128, %s20, [#allocation3]
    $region5: #{tpu_custom_call.1} parent=1 // pred_fallthru
      _
    // Predicated region
    $region6: #{tpu_custom_call.1} parent=1 // pred_check
      _
    $region7: #{tpu_custom_call.1} parent=1 // pred_check_branch
      %24 = sbr.rel (0) target = $region9
    $region8: #{tpu_custom_call.1} parent=1 // pred_region
      %s26 = ssub.s32 256, 256
      %27 = vsyncadd [#allocation6], %s26
      %s28 = sshll.u32 [#allocation5], 4
      %s29 = int_to_ptr.vmem [resolvable:$true] %s28
      %34 = dma.hbm_to_vmem [thread:$0]  %s1, 256, %s29, [#allocation6], 128, 128, 8
    $region9: #{tpu_custom_call.1} parent=1 // pred_fallthru
      _
    // Predicated region
    $region10: #{tpu_custom_call.1} parent=1 // pred_check
      _
    $region11: #{tpu_custom_call.1} parent=1 // pred_check_branch
      %36 = sbr.rel (0) target = $region13
    $region12: #{tpu_custom_call.1} parent=1 // pred_region
      _
    $region13: #{tpu_custom_call.1} parent=1 // pred_fallthru
      _
    // Predicated region
    $region14: #{tpu_custom_call.1} parent=1 // pred_check
      _
    $region15: #{tpu_custom_call.1} parent=1 // pred_check_branch
      %38 = sbr.rel (0) target = $region17
    $region16: #{tpu_custom_call.1} parent=1 // pred_region
      %s40 = ssub.s32 512, 512
      %41 = vsyncadd [#allocation6], %s40
      %s42 = sshll.u32 [#allocation7], 4
      %s43 = int_to_ptr.vmem [resolvable:$true] %s42
      %48 = dma.hbm_to_vmem [thread:$0]  %s3, 512, %s43, [#allocation6], 128, 128, 8
    $region17: #{tpu_custom_call.1} parent=1 // pred_fallthru
      _
    // Predicated region
    $region18: #{tpu_custom_call.1} parent=1 // pred_check
      _
    $region19: #{tpu_custom_call.1} parent=1 // pred_check_branch
      %50 = sbr.rel (0) target = $region21
    $region20: #{tpu_custom_call.1} parent=1 // pred_region
      _
    $region21: #{tpu_custom_call.1} parent=1 // pred_fallthru
      _
    // Predicated region
    $region22: #{tpu_custom_call.1} parent=1 // pred_check
      _
    $region23: #{tpu_custom_call.1} parent=1 // pred_check_branch
      %52 = sbr.rel (0) target = $region25
    $region24: #{tpu_custom_call.1} parent=1 // pred_region
      %53 = dma.done [#allocation3], 128
    $region25: #{tpu_custom_call.1} parent=1 // pred_fallthru
      _
    // Predicated region
    $region26: #{tpu_custom_call.1} parent=1 // pred_check
      _
    $region27: #{tpu_custom_call.1} parent=1 // pred_check_branch
      %55 = sbr.rel (0) target = $region29
    $region28: #{tpu_custom_call.1} parent=1 // pred_region
      %56 = dma.done [#allocation6], 256
    $region29: #{tpu_custom_call.1} parent=1 // pred_fallthru
      _
    // Predicated region
    $region30: #{tpu_custom_call.1} parent=1 // pred_check
      _
    $region31: #{tpu_custom_call.1} parent=1 // pred_check_branch
      %58 = sbr.rel (0) target = $region33
    $region32: #{tpu_custom_call.1} parent=1 // pred_region
      %59 = dma.done [#allocation6], 512
    $region33: #{tpu_custom_call.1} parent=1 // pred_fallthru
      _
    %v60 = vld [vmem:[#allocation2] sm:$0xff]
    %v61 = vld [vmem:[#allocation5] sm:$0xff]
    %v62 = vld [vmem:[#allocation5 + $0x8] sm:$0xff]
    %v63 = vld [vmem:[%s2] sm:$0x1]
    %v65 = vlaneseq
    %v66 = vshrl.u32 %v65, 7
    %v67 = vsub.s32 0, %v66
    %v68 = vrot.slane %v63, %v67
    %vm70 = vcmask 130048
    %v72 = vsel %vm70, %v60, 0
    %74 = vmatprep.subr.mxu0 0.0
    %75 = vmatpush1.msra.mxu0 %v61
    %76 = vmatprep.subr.mxu0 0.0
    %77 = vmatpush1.msra.mxu0 %v62
    %78 = vmatprep.subr.mxu0 0.0
    %79 = vmatpush1.msra.mxu0 0.0
    %80 = vmatprep.subr.mxu0 0.0
    %81 = vmatpush1.msra.mxu0 0.0
    %82 = vmatprep.subr.mxu0 0.0
    %83 = vmatpush1.msra.mxu0 0.0
    %84 = vmatprep.subr.mxu0 0.0
    %85 = vmatpush1.msra.mxu0 0.0
    %86 = vmatprep.subr.mxu0 0.0
    %87 = vmatpush1.msra.mxu0 0.0
    %88 = vmatprep.subr.mxu0 0.0
    %89 = vmatpush1.msra.mxu0 0.0
    %90 = vmatprep.subr.mxu0 0.0
    %91 = vmatpush1.msra.mxu0 0.0
    %92 = vmatprep.subr.mxu0 0.0
    %93 = vmatpush1.msra.mxu0 0.0
    %94 = vmatprep.subr.mxu0 0.0
    %95 = vmatpush1.msra.mxu0 0.0
    %96 = vmatprep.subr.mxu0 0.0
    %97 = vmatpush1.msra.mxu0 0.0
    %98 = vmatprep.subr.mxu0 0.0
    %99 = vmatpush1.msra.mxu0 0.0
    %100 = vmatprep.subr.mxu0 0.0
    %101 = vmatpush1.msra.mxu0 0.0
    %102 = vmatprep.subr.mxu0 0.0
    %103 = vmatpush1.msra.mxu0 0.0
    %104 = vmatprep.subr.mxu0 0.0
    %105 = vmatpush1.msra.mxu0 0.0
    %106 = vmatprep.subr.mxu0 0.0
    %107 = vmatpush1.msra.mxu0 0.0
    %108 = vmatprep.subr.mxu0 0.0
    %109 = vmatpush1.msra.mxu0 0.0
    %110 = vmatprep.subr.mxu0 0.0
    %111 = vmatpush1.msra.mxu0 0.0
    %112 = vmatprep.subr.mxu0 0.0
    %113 = vmatpush1.msra.mxu0 0.0
    %114 = vmatprep.subr.mxu0 0.0
    %115 = vmatpush1.msra.mxu0 0.0
    %116 = vmatprep.subr.mxu0 0.0
    %117 = vmatpush1.msra.mxu0 0.0
    %118 = vmatprep.subr.mxu0 0.0
    %119 = vmatpush1.msra.mxu0 0.0
    %120 = vmatprep.subr.mxu0 0.0
    %121 = vmatpush1.msra.mxu0 0.0
    %122 = vmatprep.subr.mxu0 0.0
    %123 = vmatpush1.msra.mxu0 0.0
    %124 = vmatprep.subr.mxu0 0.0
    %125 = vmatpush1.msra.mxu0 0.0
    %126 = vmatprep.subr.mxu0 0.0
    %127 = vmatpush1.msra.mxu0 0.0
    %128 = vmatprep.subr.mxu0 0.0
    %129 = vmatpush1.msra.mxu0 0.0
    %130 = vmatprep.subr.mxu0 0.0
    %131 = vmatpush1.msra.mxu0 0.0
    %132 = vmatprep.subr.mxu0 0.0
    %133 = vmatpush1.msra.mxu0 0.0
    %134 = vmatprep.subr.mxu0 0.0
    %135 = vmatpush1.msra.mxu0 0.0
    %136 = vmatprep.subr.mxu0 0.0
    %137 = vmatpush1.msra.mxu0 0.0
    %138 = vmatprep.mubr.f32.mxu0 0.0
    %139 = vmatmul.mubr.f32.gmra.mrb[0].mxu0 %v72
    %v140 = vpop.f32.mrb[0].mxu0
    %v141 = vadd.f32 %v68, %v140
    %v142 = vpop.f32.mrb[0].mxu0
    %143 = vdwg.mxu0
    %v144 = vmax.f32 %v141, 0.0
    %v145 = vld [vmem:[#allocation7] sm:$0xff]
    %v146 = vld [vmem:[#allocation7 + $0x8] sm:$0xff]
    %v147 = vld [vmem:[#allocation7 + $0x10] sm:$0xff]
    %v148 = vld [vmem:[#allocation7 + $0x18] sm:$0xff]
    %v149 = vld [vmem:[%s4] sm:$0x1]
    %v151 = vlaneseq
    %v152 = vshrl.u32 %v151, 7
    %v153 = vsub.s32 0, %v152
    %v154 = vrot.slane %v149, %v153
    %vm156 = vcmask 261120
    %v158 = vsel %vm156, %v144, 0
    %160 = vmatprep.subr.mxu0 0.0
    %161 = vmatpush1.msra.mxu0 %v145
    %162 = vmatprep.subr.mxu0 0.0
    %163 = vmatpush1.msra.mxu0 %v146
    %164 = vmatprep.subr.mxu0 0.0
    %165 = vmatpush1.msra.mxu0 %v147
    %166 = vmatprep.subr.mxu0 0.0
    %167 = vmatpush1.msra.mxu0 %v148
    %168 = vmatprep.subr.mxu0 0.0
    %169 = vmatpush1.msra.mxu0 0.0
    %170 = vmatprep.subr.mxu0 0.0
    %171 = vmatpush1.msra.mxu0 0.0
    %172 = vmatprep.subr.mxu0 0.0
    %173 = vmatpush1.msra.mxu0 0.0
    %174 = vmatprep.subr.mxu0 0.0
    %175 = vmatpush1.msra.mxu0 0.0
    %176 = vmatprep.subr.mxu0 0.0
    %177 = vmatpush1.msra.mxu0 0.0
    %178 = vmatprep.subr.mxu0 0.0
    %179 = vmatpush1.msra.mxu0 0.0
    %180 = vmatprep.subr.mxu0 0.0
    %181 = vmatpush1.msra.mxu0 0.0
    %182 = vmatprep.subr.mxu0 0.0
    %183 = vmatpush1.msra.mxu0 0.0
    %184 = vmatprep.subr.mxu0 0.0
    %185 = vmatpush1.msra.mxu0 0.0
    %186 = vmatprep.subr.mxu0 0.0
    %187 = vmatpush1.msra.mxu0 0.0
    %188 = vmatprep.subr.mxu0 0.0
    %189 = vmatpush1.msra.mxu0 0.0
    %190 = vmatprep.subr.mxu0 0.0
    %191 = vmatpush1.msra.mxu0 0.0
    %192 = vmatprep.subr.mxu0 0.0
    %193 = vmatpush1.msra.mxu0 0.0
    %194 = vmatprep.subr.mxu0 0.0
    %195 = vmatpush1.msra.mxu0 0.0
    %196 = vmatprep.subr.mxu0 0.0
    %197 = vmatpush1.msra.mxu0 0.0
    %198 = vmatprep.subr.mxu0 0.0
    %199 = vmatpush1.msra.mxu0 0.0
    %200 = vmatprep.subr.mxu0 0.0
    %201 = vmatpush1.msra.mxu0 0.0
    %202 = vmatprep.subr.mxu0 0.0
    %203 = vmatpush1.msra.mxu0 0.0
    %204 = vmatprep.subr.mxu0 0.0
    %205 = vmatpush1.msra.mxu0 0.0
    %206 = vmatprep.subr.mxu0 0.0
    %207 = vmatpush1.msra.mxu0 0.0
    %208 = vmatprep.subr.mxu0 0.0
    %209 = vmatpush1.msra.mxu0 0.0
    %210 = vmatprep.subr.mxu0 0.0
    %211 = vmatpush1.msra.mxu0 0.0
    %212 = vmatprep.subr.mxu0 0.0
    %213 = vmatpush1.msra.mxu0 0.0
    %214 = vmatprep.subr.mxu0 0.0
    %215 = vmatpush1.msra.mxu0 0.0
    %216 = vmatprep.subr.mxu0 0.0
    %217 = vmatpush1.msra.mxu0 0.0
    %218 = vmatprep.subr.mxu0 0.0
    %219 = vmatpush1.msra.mxu0 0.0
    %220 = vmatprep.subr.mxu0 0.0
    %221 = vmatpush1.msra.mxu0 0.0
    %222 = vmatprep.subr.mxu0 0.0
    %223 = vmatpush1.msra.mxu0 0.0
    %224 = vmatprep.mubr.f32.mxu0 0.0
    %225 = vmatmul.mubr.f32.gmra.mrb[0].mxu0 %v158
    %v226 = vpop.f32.mrb[0].mxu0
    %v227 = vadd.f32 %v154, %v226
    %v228 = vpop.f32.mrb[0].mxu0
    %229 = vdwg.mxu0
    %230 = vmax.xlane.f32.xlu0 %v227
    %v231 = vpop.xlane.xlu0 %230
    %v232 = vsub.f32 %v227, %v231
    %v233 = vmul.f32 %v232, 1.442695
    %v234 = vpow.pop %v233
    %235 = vadd.xlane.f32.xlu0 %v234
    %v236 = vpop.xlane.xlu0 %235
    %v237 = vrcp.pop %v236
    %v238 = vmul.f32 %v234, %v237
    %239 = vst [vmem:[#allocation8] sm:$0xff] %v238
    // Predicated region
    $region34: #{tpu_custom_call.1} parent=1 // pred_check
      _
    $region35: #{tpu_custom_call.1} parent=1 // pred_check_branch
      %241 = sbr.rel (0) target = $region37
    $region36: #{tpu_custom_call.1} parent=1 // pred_region
      %s243 = ssub.s32 128, 128
      %244 = vsyncadd [#allocation4], %s243
      %s246 = sshll.u32 [#allocation8], 4
      %s247 = int_to_ptr.vmem [resolvable:$true] %s246
      %249 = dma.vmem_to_hbm [thread:$0]  %s247, 128, %s5, [#allocation4]
    $region37: #{tpu_custom_call.1} parent=1 // pred_fallthru
      _
    // Predicated region
    $region38: #{tpu_custom_call.1} parent=1 // pred_check
      _
    $region39: #{tpu_custom_call.1} parent=1 // pred_check_branch
      %251 = sbr.rel (0) target = $region41
    $region40: #{tpu_custom_call.1} parent=1 // pred_region
      %252 = dma.done [#allocation4], 128
    $region41: #{tpu_custom_call.1} parent=1 // pred_fallthru
      _
    %253 = vsyncpa [#allocation3], 1
    %254 = vsyncpa [#allocation6], 1
    %255 = vsyncpa [#allocation4], 1

</llo_original>
